<compile_context>
chip_gen: v7x
topology: tpu7x:2x2x1
jax: 0.10.0
libtpu: 0.0.40
codegen_flags: <defaults>
</compile_context>

<pallas_src>
import functools
import math

import jax
import jax.numpy as jnp
import numpy as np
from jax.experimental import pallas as pl
from jax.experimental.pallas import tpu as pltpu


def _pick_tile(dim, target, mult):
    """Largest tile <= target that divides `dim` and is a multiple of `mult`.
    Falls back to the full dim (always a legal BlockSpec block size)."""
    if dim <= target:
        return dim
    t = (target // mult) * mult
    while t >= mult:
        if dim % t == 0:
            return t
        t -= mult
    return dim


# ----------------------------------------------------------------------------
# Projection kernel:  x (B, S, D) @ W^T (as per-head slabs)  ->  (B, h, S, d_k)
# The PyTorch `.view(..., h, d_k).transpose(1, 2)` head split is fused into the
# output BlockSpec, so there is no XLA-side transpose round trip over the
# activations.  Full-K contraction per step -> no accumulator / epilogue.
# ----------------------------------------------------------------------------
def _proj_split_heads_kernel(x_ref, w_ref, o_ref):
    # x_ref: (1, tm, D); w_ref: (1, D, d_k); o_ref: (1, 1, tm, d_k)
    o_ref[0, 0] = jnp.dot(x_ref[0], w_ref[0],
                          preferred_element_type=jnp.float32).astype(o_ref.dtype)


def project_split_heads(x, w_hd, *, tm_target=512):
    """x: (B, S, D); w_hd: (h, D, d_k) per-head column slabs of W^T.
    Returns split_heads(x @ W^T) with shape (B, h, S, d_k)."""
    B, S, D = x.shape
    h, D2, d_k = w_hd.shape
    assert D == D2 and h * d_k == D
    tm = _pick_tile(S, tm_target, 8)

    return pl.pallas_call(
        _proj_split_heads_kernel,
        out_shape=jax.ShapeDtypeStruct((B, h, S, d_k), x.dtype),
        grid_spec=pltpu.PrefetchScalarGridSpec(
            num_scalar_prefetch=0,
            # Head axis innermost: the x tile block index is unchanged across
            # the head loop, so it is fetched once per (b, m) while the weight
            # slabs stream.
            grid=(B, S // tm, h),
            in_specs=[
                pl.BlockSpec((1, tm, D), lambda b, m, hh: (b, m, 0)),    # activations
                pl.BlockSpec((1, D, d_k), lambda b, m, hh: (hh, 0, 0)),  # W^T head slab
            ],
            out_specs=pl.BlockSpec((1, 1, tm, d_k),
                                   lambda b, m, hh: (b, hh, m, 0)),
        ),
        compiler_params=pltpu.CompilerParams(
            dimension_semantics=("parallel", "parallel", "arbitrary")),
    )(x, w_hd)


# ----------------------------------------------------------------------------
# Flash-style attention with all heads per grid step and the Wo projection
# fused into the finalize.  grid = (B, S//tq, S//tk); the kv axis is the
# reduction ("arbitrary") axis.
# ----------------------------------------------------------------------------
def _flash_mha_kernel(q_ref, k_ref, v_ref, mask_ref, wo_ref, o_ref,
                      m_ref, l_ref, acc_ref, *, approx_recip):
    ki = pl.program_id(2)
    n_k = pl.num_programs(2)

    @pl.when(ki == 0)
    def _():
        m_ref[...] = jnp.full_like(m_ref, -jnp.inf)
        l_ref[...] = jnp.zeros_like(l_ref)
        acc_ref[...] = jnp.zeros_like(acc_ref)

    h = q_ref.shape[1]
    d_k = q_ref.shape[3]
    scale = 1.0 / math.sqrt(d_k)

    # Scale q (tq*d_k elements) rather than the scores (tq*tk per kv step).
    q = q_ref[0] * scale          # (h, tq, d_k)
    k = k_ref[0]                  # (h, tk, d_k)
    v = v_ref[0]                  # (h, tk, d_k)
    keep = mask_ref[0, 0] != 0    # (tq, tk), shared by all heads (read once)

    # 'hqd,hkd->hqk': K-transpose folded into the MXU operand feed; heads batched.
    s = jnp.einsum("hqd,hkd->hqk", q, k, preferred_element_type=jnp.float32)
    # Reference quirk: masked_fill_(mask == 0, 1e-9) on the *scaled* scores.
    s = jnp.where(keep[None, :, :], s, jnp.float32(1e-9))

    m_prev = m_ref[...]                                            # (h, tq, 1)
    m_new = jnp.maximum(m_prev, jnp.max(s, axis=-1, keepdims=True))
    alpha = jnp.exp(m_prev - m_new)
    # TODO(synk): on v6e/v7x a production bf16 path could compute exp in bf16
    # (EUP bf16) — kept in f32 here for accuracy.
    p = jnp.exp(s - m_new)                                         # (h, tq, tk)
    l_ref[...] = alpha * l_ref[...] + jnp.sum(p, axis=-1, keepdims=True)
    acc_ref[...] = alpha * acc_ref[...] + jnp.einsum(
        "hqk,hkd->hqd", p.astype(v.dtype), v, preferred_element_type=jnp.float32)
    m_ref[...] = m_new
    # TODO(synk): train-time dropout on p would need pltpu.prng_seed + prng_random_bits.

    @pl.when(ki == n_k - 1)
    def _():
        inv_l = pl.reciprocal(l_ref[...], approx=approx_recip)     # (h, tq, 1)
        ctx = (acc_ref[...] * inv_l).astype(wo_ref.dtype)          # (h, tq, d_k)
        # concat_h(ctx_h) -> (tq, D); pure vreg/lane placement when d_k % 128 == 0.
        ctx_full = jnp.concatenate([ctx[i] for i in range(h)], axis=-1)
        # Single Wo matmul contracting over D (MXU-filling), Wo^T is VMEM-resident.
        o_ref[0] = jnp.dot(ctx_full, wo_ref[...],
                           preferred_element_type=jnp.float32).astype(o_ref.dtype)


def mha_forward(q, k, v, mask, wq_t, wo_t, h, *, compute_dtype=None,
                tq_target=128, tk_target=256, proj_tm_target=512,
                vmem_limit_bytes=None):
    """q, k, v: (B, S, D); mask: (B, 1, S, S) 0/1 (int8 preferred);
    wq_t / wo_t: (D, D) pre-transposed so the kernel computes x @ W^T == nn.Linear.
    NOTE: on v5e use tk_target=128 (128-wide MXU); for very large D on v7x set
    vmem_limit_bytes explicitly (Wo^T is kept VMEM-resident)."""
    B, S, D = q.shape
    assert D % h == 0, "d_model must be a multiple of h"
    d_k = D // h

    cd = compute_dtype if compute_dtype is not None else q.dtype
    q, k, v = q.astype(cd), k.astype(cd), v.astype(cd)
    wq_t, wo_t = wq_t.astype(cd), wo_t.astype(cd)

    if mask is None:
        mask = jnp.ones((B, 1, S, S), jnp.int8)
    elif mask.dtype.itemsize > 1:
        mask = mask.astype(jnp.int8)   # pass bool/int8 from the caller to avoid this pass

    # Per-head column slabs of Wq^T: (h, D, d_k).  (D^2 transpose — negligible.)
    wq_hd = wq_t.reshape(D, h, d_k).transpose(1, 0, 2)

    # Reference quirk: q, k AND v are all projected with Wq.
    Qh = project_split_heads(q, wq_hd, tm_target=proj_tm_target)   # (B, h, S, d_k)
    Kh = project_split_heads(k, wq_hd, tm_target=proj_tm_target)
    Vh = project_split_heads(v, wq_hd, tm_target=proj_tm_target)

    tq = _pick_tile(S, tq_target, 8)
    tk = _pick_tile(S, tk_target, 128)  # mask tile lane dim must be 128-aligned (or == S)
    n_q, n_k = S // tq, S // tk

    approx_recip = np.dtype(cd) != np.dtype(jnp.float32)
    kernel = functools.partial(_flash_mha_kernel, approx_recip=approx_recip)

    return pl.pallas_call(
        kernel,
        out_shape=jax.ShapeDtypeStruct((B, S, D), cd),
        grid_spec=pltpu.PrefetchScalarGridSpec(
            num_scalar_prefetch=0,
            grid=(B, n_q, n_k),
            in_specs=[
                pl.BlockSpec((1, h, tq, d_k), lambda b, qi, ki: (b, 0, qi, 0)),  # Q (all heads)
                pl.BlockSpec((1, h, tk, d_k), lambda b, qi, ki: (b, 0, ki, 0)),  # K (all heads)
                pl.BlockSpec((1, h, tk, d_k), lambda b, qi, ki: (b, 0, ki, 0)),  # V (all heads)
                pl.BlockSpec((1, 1, tq, tk), lambda b, qi, ki: (b, 0, qi, ki)),  # mask (int8)
                pl.BlockSpec((D, D), lambda b, qi, ki: (0, 0)),                  # Wo^T resident
            ],
            out_specs=pl.BlockSpec((1, tq, D), lambda b, qi, ki: (b, qi, 0)),
            scratch_shapes=[
                pltpu.VMEM((h, tq, 1), jnp.float32),    # running max
                pltpu.VMEM((h, tq, 1), jnp.float32),    # running denom
                pltpu.VMEM((h, tq, d_k), jnp.float32),  # per-head context accumulator
            ]),
        compiler_params=pltpu.CompilerParams(
            dimension_semantics=("parallel", "parallel", "arbitrary"),
            vmem_limit_bytes=vmem_limit_bytes),
    )(Qh, Kh, Vh, mask, wo_t)


def ref_forward(q, k, v, mask, wq_t, wo_t, h):
    """Pure-JAX reference mirroring the PyTorch module exactly (f32)."""
    B, S, D = q.shape
    d_k = D // h
    Q, K, V = q @ wq_t, k @ wq_t, v @ wq_t

    def split(x):
        return x.reshape(B, S, h, d_k).transpose(0, 2, 1, 3)  # (B, h, S, d_k)

    Qh, Kh, Vh = split(Q), split(K), split(V)
    scores = jnp.einsum("bhqd,bhkd->bhqk", Qh, Kh) / math.sqrt(d_k)
    scores = jnp.where(mask == 0, 1e-9, scores)
    p = jax.nn.softmax(scores, axis=-1)
    ctx = jnp.einsum("bhqk,bhkd->bhqd", p, Vh)
    ctx = ctx.transpose(0, 2, 1, 3).reshape(B, S, D)
    return ctx @ wo_t


if __name__ == "__main__":
    # Small but tiling-exercising shapes: 4 q-tiles x 2 kv-tiles, 4 heads.
    B, S, d_model, h = 2, 512, 128, 4
    key = jax.random.PRNGKey(0)
    kq, kk, kv, kwq, kwk, kwv, kwo = jax.random.split(key, 7)

    q = jax.random.normal(kq, (B, S, d_model), dtype=jnp.float32)
    k = jax.random.normal(kk, (B, S, d_model), dtype=jnp.float32)
    v = jax.random.normal(kv, (B, S, d_model), dtype=jnp.float32)

    bound = 1.0 / math.sqrt(d_model)
    Wq = jax.random.uniform(kwq, (d_model, d_model), jnp.float32, -bound, bound)
    Wk = jax.random.uniform(kwk, (d_model, d_model), jnp.float32, -bound, bound)  # unused (matches reference forward)
    Wv = jax.random.uniform(kwv, (d_model, d_model), jnp.float32, -bound, bound)  # unused (matches reference forward)
    Wo = jax.random.uniform(kwo, (d_model, d_model), jnp.float32, -bound, bound)

    causal = jnp.tril(jnp.ones((S, S), dtype=jnp.int8))
    mask = jnp.broadcast_to(causal[None, None, :, :], (B, 1, S, S))

    wq_t = Wq.T   # (d_in, d_out) so kernel computes x @ W^T == nn.Linear
    wo_t = Wo.T

    expected = ref_forward(q, k, v, mask, wq_t, wo_t, h)

    # f32 path — strict correctness check.
    out = mha_forward(q, k, v, mask, wq_t, wo_t, h)
    out = jax.block_until_ready(out)
    np.testing.assert_allclose(np.asarray(out), np.asarray(expected),
                               rtol=5e-5, atol=5e-5)

    # bf16 compute path (v6e/v7x production setting): bf16 MXU operands,
    # f32 accumulators / softmax state.  Loose tolerance vs. the f32 reference.
    out_bf16 = mha_forward(q, k, v, mask, wq_t, wo_t, h,
                           compute_dtype=jnp.bfloat16)
    out_bf16 = jax.block_until_ready(out_bf16)
    np.testing.assert_allclose(np.asarray(out_bf16, dtype=np.float32),
                               np.asarray(expected), rtol=6e-2, atol=6e-2)

    print("KERNEL_OK")
</pallas_src>

<mosaic_0001>
module attributes {stable_mosaic.version = 11 : i64} {
  func.func @_proj_split_heads_kernel(%arg0: i32, %arg1: i32, %arg2: i32, %arg3: memref<1x512x128xf32, #tpu.memory_space<vmem>>, %arg4: memref<1x128x32xf32, #tpu.memory_space<vmem>>, %arg5: memref<1x1x512x32xf32, #tpu.memory_space<vmem>>) attributes {dimension_semantics = [#tpu.dimension_semantics<parallel>, #tpu.dimension_semantics<parallel>, #tpu.dimension_semantics<arbitrary>], iteration_bounds = array<i64: 2, 1, 4>, scalar_prefetch = 0 : i64, scratch_operands = 0 : i64, tpu.core_type = #tpu.core_type<tc>, window_params = [{transform_indices = @transform_0, window_bounds = array<i64: 1, 512, 128>}, {transform_indices = @transform_1, window_bounds = array<i64: 1, 128, 32>}, {transform_indices = @transform_2, window_bounds = array<i64: 1, 1, 512, 32>}]} {
    %c0 = arith.constant 0 : index
    %c0_0 = arith.constant 0 : index
    %c0_1 = arith.constant 0 : index
    %0 = vector.load %arg3[%c0, %c0_0, %c0_1] : memref<1x512x128xf32, #tpu.memory_space<vmem>>, vector<1x512x128xf32>
    %1 = vector.shape_cast %0 : vector<1x512x128xf32> to vector<512x128xf32>
    %c0_2 = arith.constant 0 : index
    %c0_3 = arith.constant 0 : index
    %c0_4 = arith.constant 0 : index
    %2 = vector.load %arg4[%c0_2, %c0_3, %c0_4] : memref<1x128x32xf32, #tpu.memory_space<vmem>>, vector<1x128x32xf32>
    %3 = vector.shape_cast %2 : vector<1x128x32xf32> to vector<128x32xf32>
    %cst = arith.constant dense<0.000000e+00> : vector<512x32xf32>
    %4 = tpu.matmul %1, %3, %cst {dimension_numbers = #tpu.dot_dimension_numbers<[1], [0], [0], [1], [0, 0, 1, 1], [], []>} : vector<512x128xf32>, vector<128x32xf32>, vector<512x32xf32> -> vector<512x32xf32>
    %c0_5 = arith.constant 0 : index
    %c0_6 = arith.constant 0 : index
    %c0_7 = arith.constant 0 : index
    %c0_8 = arith.constant 0 : index
    %5 = vector.load %arg5[%c0_5, %c0_6, %c0_7, %c0_8] : memref<1x1x512x32xf32, #tpu.memory_space<vmem>>, vector<1x1x512x32xf32>
    %6 = vector.shape_cast %5 : vector<1x1x512x32xf32> to vector<512x32xf32>
    %7 = vector.shape_cast %4 : vector<512x32xf32> to vector<1x1x512x32xf32>
    tpu.vector_store %arg5[%c0_5, %c0_6, %c0_7, %c0_8], %7 {strides = array<i32>} : memref<1x1x512x32xf32, #tpu.memory_space<vmem>>, vector<1x1x512x32xf32>,
    return
  }
  func.func @transform_0(%arg0: i32, %arg1: i32, %arg2: i32) -> (i32, i32, i32) {
    %c0_i32 = arith.constant 0 : i32
    %c0_i32_0 = arith.constant 0 : i32
    return %arg0, %arg1, %c0_i32 : i32, i32, i32
  }
  func.func @transform_1(%arg0: i32, %arg1: i32, %arg2: i32) -> (i32, i32, i32) {
    %c0_i32 = arith.constant 0 : i32
    %c0_i32_0 = arith.constant 0 : i32
    %c0_i32_1 = arith.constant 0 : i32
    return %arg2, %c0_i32, %c0_i32_0 : i32, i32, i32
  }
  func.func @transform_2(%arg0: i32, %arg1: i32, %arg2: i32) -> (i32, i32, i32, i32) {
    %c0_i32 = arith.constant 0 : i32
    %c0_i32_0 = arith.constant 0 : i32
    return %arg0, %arg2, %arg1, %c0_i32 : i32, i32, i32, i32
  }
}

</mosaic_0001>

<llo_original>
// kernel: tpu_custom_call.1
$region0: #{tpu_custom_call.1}
  #allocation0 [shape = 'u32[]', space=smem, size = 0x4, offset = 0x4, fixed_abs, tag = 'smem constant byte address 0x4 - core index']
  #allocation1 [shape = 'u32[144,128]{1,0:T(1,128)}', space=vmem, size = 0x12000, scoped, tag = 'internal scratch']
  %s0 = inlined_call_operand.hbm [shape: f32[2,512,128], index: 0, kind: input, shape index: {}]
  %s1 = inlined_call_operand.vmem [shape: f32[4,128,32], index: 1, kind: input, shape index: {}]
  %s2 = inlined_call_operand.vmem [shape: f32[2,4,512,32], index: 2, kind: output, shape index: {}]
  %s3 = sld [smem:[#allocation0]]
  $region45: #{tpu_custom_call.1} parent=0
    _
  %s5 = ssub.s32 1, %s3
  %s6 = scalar_select 0, %s5, %s3
  $region1: #{tpu_custom_call.1} parent=0
    #allocation2 [shape = 'u8[524288]{0}', space=vmem, size = 0x80000, scoped, tag = 'input window, operand 0']
    #allocation3 [shape = 's32[2]{0}', space=sflag, size = 0x8, scoped, tag = 'scoped memory for tpu_custom_call.1']
    %7 = vsyncpa [#allocation3], 0
    %s8 = scalar_lea.sflag [#allocation3], 1
    %9 = vsyncpa %s8, 0
    loop: start=0, step=1, limit=10
    $region2: #{tpu_custom_call.1} parent=1 // loop_pre_header
      _
    $region3: #{tpu_custom_call.1} parent=1 // loop_header
      %s11 = sphi 0, %s15
      %p12 = scmp.ge.s32.totalorder %s11, 10
      %s18 = sphi 0, %s37
      %s19 = sphi 0, %s33
      %s20 = sphi 0, %s29
      %s21 = sphi 0, %s18
      %s22 = sphi 0, %s19
      %s23 = sphi 0, %s20
      %s24 = sphi 0, %s21
      %s25 = sphi 0, %s22
      %s26 = sphi 0, %s23
      %s42 = sphi 0, %s44
      %s45 = sphi 0, %s42
      %s46 = sphi 0, %s45
      %s62 = sphi 0, %s46
      %s68 = sphi 0, %s70
      %s71 = sphi 0, %s68
      %s72 = sphi 0, %s71
      %s88 = sphi 0, %s72
      %s98 = sphi 0, %s100
      %s101 = sphi 0, %s98
      %s102 = sphi 0, %s101
      %s118 = sphi 0, %s102
    $region4: #{tpu_custom_call.1} parent=1 // loop_header_branch
      %14 = sbr.rel (%p12) target = $region8
    $region5: #{tpu_custom_call.1} parent=1 // loop_body
      %s16 = ssub.s32 %s11, 1
      %s17 = ssub.s32 %s11, 2
      %s27 = sadd.s32 1, %s20
      %p28 = scmp.ge.s32.totalorder %s27, 4
      %s29 = scalar_select %p28, 0, %s27
      %s30 = sadd.s32 1, %s19
      %s31 = scalar_select %p28, %s30, %s19
      %p32 = scmp.ge.s32.totalorder %s31, 1
      %s33 = scalar_select %p32, 0, %s31
      %s34 = sadd.s32 1, %s18
      %s35 = scalar_select %p32, %s34, %s18
      %p36 = scmp.ge.s32.totalorder %s35, 2
      %s37 = scalar_select %p36, 0, %s35
      %s38 = ssub.s32 %s18, %s37
      %s39 = ssub.s32 %s19, %s33
      %s40 = sor.u32 %s38, %s39
      %p41 = scmp.eq.s32.totalorder %s40, 0
      %s43 = sadd.s32 %s42, 1
      %s44 = scalar_select %p41, %s42, %s43
      %p47 = pneg %p41
      %p48 = scmp.eq.s32.totalorder %s11, 7
      %p49 = por %p47, %p48
      %p50 = scmp.ne.s32.totalorder %s42, %s45
      %p51 = scmp.eq.s32.totalorder %s11, 0
      %p52 = por %p50, %p51
      %p53 = scmp.ne.s32.totalorder %s42, %s45
      %p54 = scmp.eq.s32.totalorder %s16, 7
      %p55 = por %p53, %p54
      %p56 = scmp.ne.s32.totalorder %s45, %s46
      %p57 = scmp.eq.s32.totalorder %s16, 0
      %p58 = por %p56, %p57
      %p59 = scmp.ne.s32.totalorder %s45, %s46
      %p60 = scmp.eq.s32.totalorder %s17, 7
      %p61 = por %p59, %p60
      %p63 = scmp.ne.s32.totalorder %s46, %s62
      %p64 = scmp.eq.s32.totalorder %s17, 0
      %p65 = por %p63, %p64
      %s66 = ssub.s32 %s20, %s29
      %p67 = scmp.eq.s32.totalorder %s66, 0
      %s69 = sadd.s32 %s68, 1
      %s70 = scalar_select %p67, %s68, %s69
      %p73 = pneg %p67
      %p74 = scmp.eq.s32.totalorder %s11, 7
      %p75 = por %p73, %p74
      %p76 = scmp.ne.s32.totalorder %s68, %s71
      %p77 = scmp.eq.s32.totalorder %s11, 0
      %p78 = por %p76, %p77
      %p79 = scmp.ne.s32.totalorder %s68, %s71
      %p80 = scmp.eq.s32.totalorder %s16, 7
      %p81 = por %p79, %p80
      %p82 = scmp.ne.s32.totalorder %s71, %s72
      %p83 = scmp.eq.s32.totalorder %s16, 0
      %p84 = por %p82, %p83
      %p85 = scmp.ne.s32.totalorder %s71, %s72
      %p86 = scmp.eq.s32.totalorder %s17, 7
      %p87 = por %p85, %p86
      %p89 = scmp.ne.s32.totalorder %s72, %s88
      %p90 = scmp.eq.s32.totalorder %s17, 0
      %p91 = por %p89, %p90
      %s92 = ssub.s32 %s18, %s37
      %s93 = ssub.s32 %s20, %s29
      %s94 = sor.u32 %s92, %s93
      %s95 = ssub.s32 %s19, %s33
      %s96 = sor.u32 %s94, %s95
      %p97 = scmp.eq.s32.totalorder %s96, 0
      %s99 = sadd.s32 %s98, 1
      %s100 = scalar_select %p97, %s98, %s99
      %p103 = pneg %p97
      %p104 = scmp.eq.s32.totalorder %s11, 7
      %p105 = por %p103, %p104
      %p106 = scmp.ne.s32.totalorder %s98, %s101
      %p107 = scmp.eq.s32.totalorder %s11, 0
      %p108 = por %p106, %p107
      %p109 = scmp.ne.s32.totalorder %s98, %s101
      %p110 = scmp.eq.s32.totalorder %s16, 7
      %p111 = por %p109, %p110
      %p112 = scmp.ne.s32.totalorder %s101, %s102
      %p113 = scmp.eq.s32.totalorder %s16, 0
      %p114 = por %p112, %p113
      %p115 = scmp.ne.s32.totalorder %s101, %s102
      %p116 = scmp.eq.s32.totalorder %s17, 7
      %p117 = por %p115, %p116
      %p119 = scmp.ne.s32.totalorder %s102, %s118
      %p120 = scmp.eq.s32.totalorder %s17, 0
      %p121 = por %p119, %p120
      %p122 = scmp.le.s32.totalorder 1, %s11
      %p123 = scmp.lt.s32.totalorder %s11, 9
      %p124 = pnand %p122, %p123
      %p125 = pneg %p124
      // Predicated region
      $region9: #{tpu_custom_call.1} parent=5 // pred_check
        _
      $region10: #{tpu_custom_call.1} parent=5 // pred_check_branch
        %127 = sbr.rel (%p124) target = $region12
      $region11: #{tpu_custom_call.1} parent=5 // pred_region
        %s128 = ssub.s32 %s11, 1
      $region12: #{tpu_custom_call.1} parent=5 // pred_fallthru
        _
      %p129 = scmp.lt.s32.totalorder %s11, 8
      // Predicated region
      $region13: #{tpu_custom_call.1} parent=5 // pred_check
        %p130 = pneg %p129
      $region14: #{tpu_custom_call.1} parent=5 // pred_check_branch
        %132 = sbr.rel (%p130) target = $region16
      $region15: #{tpu_custom_call.1} parent=5 // pred_region
        // Predicated region
        $region17: #{tpu_custom_call.1} parent=15 // pred_check
          %p133 = pneg %p52
        $region18: #{tpu_custom_call.1} parent=15 // pred_check_branch
          %135 = sbr.rel (%p133) target = $region20
        $region19: #{tpu_custom_call.1} parent=15 // pred_region
          %s136 = sand.u32 %s42, 1
          %s137 = scalar_lea.sflag [#allocation3], %s136
          %s138 = sand.u32 %s42, 1
          %s139 = smul.addr %s138, 512
          %s140 = scalar_lea.vmem [#allocation2], %s139
          %s141 = smul.u32 64, %s19
          %s143 = ssub.s32 8192, 8192
          %144 = vsyncadd %s137, %s143
          %s145 = smul.addr %s18, 64
          %s146 = sadd.s32 %s141, %s145
          %s147 = smul.addr %s146, 128
          %s148 = scalar_lea.hbm %s0, %s147
          %s149 = sshll.u32 %s140, 4
          %s150 = int_to_ptr.vmem [resolvable:$true] %s149
          %155 = dma.hbm_to_vmem [thread:$0]  %s148, 8192, %s150, %s137, 128, 128, 8
        $region20: #{tpu_custom_call.1} parent=15 // pred_fallthru
          _
        // Predicated region
        $region21: #{tpu_custom_call.1} parent=15 // pred_check
          %p156 = pneg %p78
        $region22: #{tpu_custom_call.1} parent=15 // pred_check_branch
          %158 = sbr.rel (%p156) target = $region24
        $region23: #{tpu_custom_call.1} parent=15 // pred_region
          %p159 = scmp.lt.s32.totalorder %s20, 3
          %s160 = scalar_select %p159, %s20, 3
          %s161 = smul.addr %s160, 16
          %s162 = smul.addr %s161, 8
          %s163 = scalar_lea.vmem %s1, %s162
        $region24: #{tpu_custom_call.1} parent=15 // pred_fallthru
          _
      $region16: #{tpu_custom_call.1} parent=5 // pred_fallthru
        _
      %p164 = scmp.le.s32.totalorder 1, %s11
      %p165 = scmp.lt.s32.totalorder %s11, 9
      %p166 = pnand %p164, %p165
      %p167 = pneg %p166
      // Predicated region
      $region25: #{tpu_custom_call.1} parent=5 // pred_check
        _
      $region26: #{tpu_custom_call.1} parent=5 // pred_check_branch
        %169 = sbr.rel (%p166) target = $region28
      $region27: #{tpu_custom_call.1} parent=5 // pred_region
        %s170 = ssub.s32 %s11, 1
        %s171 = sand.u32 %s45, 1
        %s172 = scalar_lea.sflag [#allocation3], %s171
        %s173 = sand.u32 %s45, 1
        %s174 = smul.addr %s173, 512
        %s175 = scalar_lea.vmem [#allocation2], %s174
        // Predicated region
        $region29: #{tpu_custom_call.1} parent=27 // pred_check
          %p176 = pneg %p58
        $region30: #{tpu_custom_call.1} parent=27 // pred_check_branch
          %178 = sbr.rel (%p176) target = $region32
        $region31: #{tpu_custom_call.1} parent=27 // pred_region
          %179 = dma.done %s172, 8192
        $region32: #{tpu_custom_call.1} parent=27 // pred_fallthru
          _
        %s180 = sand.u32 %s45, 1
        %s181 = scalar_lea.sflag [#allocation3], %s180
        %s182 = sand.u32 %s45, 1
        %s183 = smul.addr %s182, 512
        %s184 = scalar_lea.vmem [#allocation2], %s183
        %p185 = pneg %p58
        %p186 = pneg %p55
        %p187 = scmp.lt.s32.totalorder %s23, 3
        %s188 = scalar_select %p187, %s23, 3
        %s189 = smul.addr %s188, 16
        %s190 = smul.addr %s189, 8
        %s191 = scalar_lea.vmem %s1, %s190
        %p192 = pneg %p84
        %p193 = pneg %p81
        %p194 = pneg %p114
        %p195 = pneg %p111
        %s196 = smul.u32 64, %s22
        %p197 = scmp.lt.s32.totalorder %s21, 1
        %s198 = scalar_select %p197, %s21, 1
        %p199 = scmp.lt.s32.totalorder %s23, 3
        %s200 = scalar_select %p199, %s23, 3
        %p201 = scmp.lt.s32.totalorder %s196, 63
        %s202 = scalar_select %p201, %s196, 63
        %s203 = smul.addr %s200, 64
        %s204 = sadd.s32 %s202, %s203
        %s205 = smul.addr %s198, 256
        %s206 = sadd.s32 %s204, %s205
        %s207 = smul.addr %s206, 8
        %s208 = scalar_lea.vmem %s2, %s207
        %s209 = smul.u32 64, %s22
        %p210 = scmp.lt.s32.totalorder %s23, 3
        %s211 = scalar_select %p210, %s23, 3
        %s212 = smul.addr %s211, 16
        %s213 = smul.addr %s212, 8
        %s214 = scalar_lea.vmem %s1, %s213
        %s215 = smul.u32 64, %s22
        %p216 = scmp.lt.s32.totalorder %s21, 1
        %s217 = scalar_select %p216, %s21, 1
        %p218 = scmp.lt.s32.totalorder %s23, 3
        %s219 = scalar_select %p218, %s23, 3
        %p220 = scmp.lt.s32.totalorder %s215, 63
        %s221 = scalar_select %p220, %s215, 63
        %s222 = smul.addr %s219, 64
        %s223 = sadd.s32 %s221, %s222
        %s224 = smul.addr %s217, 256
        %s225 = sadd.s32 %s223, %s224
        %s226 = smul.addr %s225, 8
        %s227 = scalar_lea.vmem %s2, %s226
        %s228 = smul.u32 64, %s22
        %v229 = vld [vmem:[%s175] sm:$0xff]
        %v230 = vld [vmem:[%s175 + $0x8] sm:$0xff]
        %v231 = vld [vmem:[%s175 + $0x10] sm:$0xff]
        %v232 = vld [vmem:[%s175 + $0x18] sm:$0xff]
        %v233 = vld [vmem:[%s175 + $0x20] sm:$0xff]
        %v234 = vld [vmem:[%s175 + $0x28] sm:$0xff]
        %v235 = vld [vmem:[%s175 + $0x30] sm:$0xff]
        %v236 = vld [vmem:[%s175 + $0x38] sm:$0xff]
        %v237 = vld [vmem:[%s175 + $0x40] sm:$0xff]
        %v238 = vld [vmem:[%s175 + $0x48] sm:$0xff]
        %v239 = vld [vmem:[%s175 + $0x50] sm:$0xff]
        %v240 = vld [vmem:[%s175 + $0x58] sm:$0xff]
        %v241 = vld [vmem:[%s175 + $0x60] sm:$0xff]
        %v242 = vld [vmem:[%s175 + $0x68] sm:$0xff]
        %v243 = vld [vmem:[%s175 + $0x70] sm:$0xff]
        %v244 = vld [vmem:[%s175 + $0x78] sm:$0xff]
        %v245 = vld [vmem:[%s175 + $0x80] sm:$0xff]
        %v246 = vld [vmem:[%s175 + $0x88] sm:$0xff]
        %v247 = vld [vmem:[%s175 + $0x90] sm:$0xff]
        %v248 = vld [vmem:[%s175 + $0x98] sm:$0xff]
        %v249 = vld [vmem:[%s175 + $0xa0] sm:$0xff]
        %v250 = vld [vmem:[%s175 + $0xa8] sm:$0xff]
        %v251 = vld [vmem:[%s175 + $0xb0] sm:$0xff]
        %v252 = vld [vmem:[%s175 + $0xb8] sm:$0xff]
        %v253 = vld [vmem:[%s175 + $0xc0] sm:$0xff]
        %v254 = vld [vmem:[%s175 + $0xc8] sm:$0xff]
        %v255 = vld [vmem:[%s175 + $0xd0] sm:$0xff]
        %v256 = vld [vmem:[%s175 + $0xd8] sm:$0xff]
        %v257 = vld [vmem:[%s175 + $0xe0] sm:$0xff]
        %v258 = vld [vmem:[%s175 + $0xe8] sm:$0xff]
        %v259 = vld [vmem:[%s175 + $0xf0] sm:$0xff]
        %v260 = vld [vmem:[%s175 + $0xf8] sm:$0xff]
        %v261 = vld [vmem:[%s175 + $0x100] sm:$0xff]
        %v262 = vld [vmem:[%s175 + $0x108] sm:$0xff]
        %v263 = vld [vmem:[%s175 + $0x110] sm:$0xff]
        %v264 = vld [vmem:[%s175 + $0x118] sm:$0xff]
        %v265 = vld [vmem:[%s175 + $0x120] sm:$0xff]
        %v266 = vld [vmem:[%s175 + $0x128] sm:$0xff]
        %v267 = vld [vmem:[%s175 + $0x130] sm:$0xff]
        %v268 = vld [vmem:[%s175 + $0x138] sm:$0xff]
        %v269 = vld [vmem:[%s175 + $0x140] sm:$0xff]
        %v270 = vld [vmem:[%s175 + $0x148] sm:$0xff]
        %v271 = vld [vmem:[%s175 + $0x150] sm:$0xff]
        %v272 = vld [vmem:[%s175 + $0x158] sm:$0xff]
        %v273 = vld [vmem:[%s175 + $0x160] sm:$0xff]
        %v274 = vld [vmem:[%s175 + $0x168] sm:$0xff]
        %v275 = vld [vmem:[%s175 + $0x170] sm:$0xff]
        %v276 = vld [vmem:[%s175 + $0x178] sm:$0xff]
        %v277 = vld [vmem:[%s175 + $0x180] sm:$0xff]
        %v278 = vld [vmem:[%s175 + $0x188] sm:$0xff]
        %v279 = vld [vmem:[%s175 + $0x190] sm:$0xff]
        %v280 = vld [vmem:[%s175 + $0x198] sm:$0xff]
        %v281 = vld [vmem:[%s175 + $0x1a0] sm:$0xff]
        %v282 = vld [vmem:[%s175 + $0x1a8] sm:$0xff]
        %v283 = vld [vmem:[%s175 + $0x1b0] sm:$0xff]
        %v284 = vld [vmem:[%s175 + $0x1b8] sm:$0xff]
        %v285 = vld [vmem:[%s175 + $0x1c0] sm:$0xff]
        %v286 = vld [vmem:[%s175 + $0x1c8] sm:$0xff]
        %v287 = vld [vmem:[%s175 + $0x1d0] sm:$0xff]
        %v288 = vld [vmem:[%s175 + $0x1d8] sm:$0xff]
        %v289 = vld [vmem:[%s175 + $0x1e0] sm:$0xff]
        %v290 = vld [vmem:[%s175 + $0x1e8] sm:$0xff]
        %v291 = vld [vmem:[%s175 + $0x1f0] sm:$0xff]
        %v292 = vld [vmem:[%s175 + $0x1f8] sm:$0xff]
        %v293 = vld [vmem:[%s214] sm:$0xff]
        %v294 = vld [vmem:[%s214 + $0x8] sm:$0xff]
        %v295 = vld [vmem:[%s214 + $0x10] sm:$0xff]
        %v296 = vld [vmem:[%s214 + $0x18] sm:$0xff]
        %v297 = vld [vmem:[%s214 + $0x20] sm:$0xff]
        %v298 = vld [vmem:[%s214 + $0x28] sm:$0xff]
        %v299 = vld [vmem:[%s214 + $0x30] sm:$0xff]
        %v300 = vld [vmem:[%s214 + $0x38] sm:$0xff]
        %v301 = vld [vmem:[%s214 + $0x40] sm:$0xff]
        %v302 = vld [vmem:[%s214 + $0x48] sm:$0xff]
        %v303 = vld [vmem:[%s214 + $0x50] sm:$0xff]
        %v304 = vld [vmem:[%s214 + $0x58] sm:$0xff]
        %v305 = vld [vmem:[%s214 + $0x60] sm:$0xff]
        %v306 = vld [vmem:[%s214 + $0x68] sm:$0xff]
        %v307 = vld [vmem:[%s214 + $0x70] sm:$0xff]
        %v308 = vld [vmem:[%s214 + $0x78] sm:$0xff]
        %309 = vmatprep.subr.mxu0 0.0
        %310 = vmatpush1.msra.mxu0 %v293
        %311 = vmatprep.subr.mxu0 0.0
        %312 = vmatpush1.msra.mxu0 %v294
        %313 = vmatprep.subr.mxu0 0.0
        %314 = vmatpush1.msra.mxu0 %v295
        %315 = vmatprep.subr.mxu0 0.0
        %316 = vmatpush1.msra.mxu0 %v296
        %317 = vmatprep.subr.mxu0 0.0
        %318 = vmatpush1.msra.mxu0 %v297
        %319 = vmatprep.subr.mxu0 0.0
        %320 = vmatpush1.msra.mxu0 %v298
        %321 = vmatprep.subr.mxu0 0.0
        %322 = vmatpush1.msra.mxu0 %v299
        %323 = vmatprep.subr.mxu0 0.0
        %324 = vmatpush1.msra.mxu0 %v300
        %325 = vmatprep.subr.mxu0 0.0
        %326 = vmatpush1.msra.mxu0 %v301
        %327 = vmatprep.subr.mxu0 0.0
        %328 = vmatpush1.msra.mxu0 %v302
        %329 = vmatprep.subr.mxu0 0.0
        %330 = vmatpush1.msra.mxu0 %v303
        %331 = vmatprep.subr.mxu0 0.0
        %332 = vmatpush1.msra.mxu0 %v304
        %333 = vmatprep.subr.mxu0 0.0
        %334 = vmatpush1.msra.mxu0 %v305
        %335 = vmatprep.subr.mxu0 0.0
        %336 = vmatpush1.msra.mxu0 %v306
        %337 = vmatprep.subr.mxu0 0.0
        %338 = vmatpush1.msra.mxu0 %v307
        %339 = vmatprep.subr.mxu0 0.0
        %340 = vmatpush1.msra.mxu0 %v308
        %341 = vmatprep.subr.mxu0 0.0
        %342 = vmatpush1.msra.mxu0 0.0
        %343 = vmatprep.subr.mxu0 0.0
        %344 = vmatpush1.msra.mxu0 0.0
        %345 = vmatprep.subr.mxu0 0.0
        %346 = vmatpush1.msra.mxu0 0.0
        %347 = vmatprep.subr.mxu0 0.0
        %348 = vmatpush1.msra.mxu0 0.0
        %349 = vmatprep.subr.mxu0 0.0
        %350 = vmatpush1.msra.mxu0 0.0
        %351 = vmatprep.subr.mxu0 0.0
        %352 = vmatpush1.msra.mxu0 0.0
        %353 = vmatprep.subr.mxu0 0.0
        %354 = vmatpush1.msra.mxu0 0.0
        %355 = vmatprep.subr.mxu0 0.0
        %356 = vmatpush1.msra.mxu0 0.0
        %357 = vmatprep.subr.mxu0 0.0
        %358 = vmatpush1.msra.mxu0 0.0
        %359 = vmatprep.subr.mxu0 0.0
        %360 = vmatpush1.msra.mxu0 0.0
        %361 = vmatprep.subr.mxu0 0.0
        %362 = vmatpush1.msra.mxu0 0.0
        %363 = vmatprep.subr.mxu0 0.0
        %364 = vmatpush1.msra.mxu0 0.0
        %365 = vmatprep.subr.mxu0 0.0
        %366 = vmatpush1.msra.mxu0 0.0
        %367 = vmatprep.subr.mxu0 0.0
        %368 = vmatpush1.msra.mxu0 0.0
        %369 = vmatprep.subr.mxu0 0.0
        %370 = vmatpush1.msra.mxu0 0.0
        %371 = vmatprep.subr.mxu0 0.0
        %372 = vmatpush1.msra.mxu0 0.0
        %373 = vmatprep.mubr.f32.mxu0 0.0
        %374 = vmatmul.mubr.f32.gmra.mrb[0].mxu0 %v229
        %v375 = vpop.f32.mrb[0].mxu0
        %v376 = vadd.f32 0.0, %v375
        %v377 = vpop.f32.mrb[0].mxu0
        %378 = vmatprep.mubr.f32.mxu0 0.0
        %379 = vmatmul.mubr.f32.gmra.mrb[0].mxu0 %v230
        %v380 = vpop.f32.mrb[0].mxu0
        %v381 = vadd.f32 0.0, %v380
        %v382 = vpop.f32.mrb[0].mxu0
        %383 = vmatprep.mubr.f32.mxu0 0.0
        %384 = vmatmul.mubr.f32.gmra.mrb[0].mxu0 %v231
        %v385 = vpop.f32.mrb[0].mxu0
        %v386 = vadd.f32 0.0, %v385
        %v387 = vpop.f32.mrb[0].mxu0
        %388 = vmatprep.mubr.f32.mxu0 0.0
        %389 = vmatmul.mubr.f32.gmra.mrb[0].mxu0 %v232
        %v390 = vpop.f32.mrb[0].mxu0
        %v391 = vadd.f32 0.0, %v390
        %v392 = vpop.f32.mrb[0].mxu0
        %393 = vmatprep.mubr.f32.mxu0 0.0
        %394 = vmatmul.mubr.f32.gmra.mrb[0].mxu0 %v233
        %v395 = vpop.f32.mrb[0].mxu0
        %v396 = vadd.f32 0.0, %v395
        %v397 = vpop.f32.mrb[0].mxu0
        %398 = vmatprep.mubr.f32.mxu0 0.0
        %399 = vmatmul.mubr.f32.gmra.mrb[0].mxu0 %v234
        %v400 = vpop.f32.mrb[0].mxu0
        %v401 = vadd.f32 0.0, %v400
        %v402 = vpop.f32.mrb[0].mxu0
        %403 = vmatprep.mubr.f32.mxu0 0.0
        %404 = vmatmul.mubr.f32.gmra.mrb[0].mxu0 %v235
        %v405 = vpop.f32.mrb[0].mxu0
        %v406 = vadd.f32 0.0, %v405
        %v407 = vpop.f32.mrb[0].mxu0
        %408 = vmatprep.mubr.f32.mxu0 0.0
        %409 = vmatmul.mubr.f32.gmra.mrb[0].mxu0 %v236
        %v410 = vpop.f32.mrb[0].mxu0
        %v411 = vadd.f32 0.0, %v410
        %v412 = vpop.f32.mrb[0].mxu0
        %413 = vmatprep.mubr.f32.mxu0 0.0
        %414 = vmatmul.mubr.f32.gmra.mrb[0].mxu0 %v237
        %v415 = vpop.f32.mrb[0].mxu0
        %v416 = vadd.f32 0.0, %v415
        %v417 = vpop.f32.mrb[0].mxu0
        %418 = vmatprep.mubr.f32.mxu0 0.0
        %419 = vmatmul.mubr.f32.gmra.mrb[0].mxu0 %v238
        %v420 = vpop.f32.mrb[0].mxu0
        %v421 = vadd.f32 0.0, %v420
        %v422 = vpop.f32.mrb[0].mxu0
        %423 = vmatprep.mubr.f32.mxu0 0.0
        %424 = vmatmul.mubr.f32.gmra.mrb[0].mxu0 %v239
        %v425 = vpop.f32.mrb[0].mxu0
        %v426 = vadd.f32 0.0, %v425
        %v427 = vpop.f32.mrb[0].mxu0
        %428 = vmatprep.mubr.f32.mxu0 0.0
        %429 = vmatmul.mubr.f32.gmra.mrb[0].mxu0 %v240
        %v430 = vpop.f32.mrb[0].mxu0
        %v431 = vadd.f32 0.0, %v430
        %v432 = vpop.f32.mrb[0].mxu0
        %433 = vmatprep.mubr.f32.mxu0 0.0
        %434 = vmatmul.mubr.f32.gmra.mrb[0].mxu0 %v241
        %v435 = vpop.f32.mrb[0].mxu0
        %v436 = vadd.f32 0.0, %v435
        %v437 = vpop.f32.mrb[0].mxu0
        %438 = vmatprep.mubr.f32.mxu0 0.0
        %439 = vmatmul.mubr.f32.gmra.mrb[0].mxu0 %v242
        %v440 = vpop.f32.mrb[0].mxu0
        %v441 = vadd.f32 0.0, %v440
        %v442 = vpop.f32.mrb[0].mxu0
        %443 = vmatprep.mubr.f32.mxu0 0.0
        %444 = vmatmul.mubr.f32.gmra.mrb[0].mxu0 %v243
        %v445 = vpop.f32.mrb[0].mxu0
        %v446 = vadd.f32 0.0, %v445
        %v447 = vpop.f32.mrb[0].mxu0
        %448 = vmatprep.mubr.f32.mxu0 0.0
        %449 = vmatmul.mubr.f32.gmra.mrb[0].mxu0 %v244
        %v450 = vpop.f32.mrb[0].mxu0
        %v451 = vadd.f32 0.0, %v450
        %v452 = vpop.f32.mrb[0].mxu0
        %453 = vmatprep.mubr.f32.mxu0 0.0
        %454 = vmatmul.mubr.f32.gmra.mrb[0].mxu0 %v245
        %v455 = vpop.f32.mrb[0].mxu0
        %v456 = vadd.f32 0.0, %v455
        %v457 = vpop.f32.mrb[0].mxu0
        %458 = vmatprep.mubr.f32.mxu0 0.0
        %459 = vmatmul.mubr.f32.gmra.mrb[0].mxu0 %v246
        %v460 = vpop.f32.mrb[0].mxu0
        %v461 = vadd.f32 0.0, %v460
        %v462 = vpop.f32.mrb[0].mxu0
        %463 = vmatprep.mubr.f32.mxu0 0.0
        %464 = vmatmul.mubr.f32.gmra.mrb[0].mxu0 %v247
        %v465 = vpop.f32.mrb[0].mxu0
        %v466 = vadd.f32 0.0, %v465
        %v467 = vpop.f32.mrb[0].mxu0
        %468 = vmatprep.mubr.f32.mxu0 0.0
        %469 = vmatmul.mubr.f32.gmra.mrb[0].mxu0 %v248
        %v470 = vpop.f32.mrb[0].mxu0
        %v471 = vadd.f32 0.0, %v470
        %v472 = vpop.f32.mrb[0].mxu0
        %473 = vmatprep.mubr.f32.mxu0 0.0
        %474 = vmatmul.mubr.f32.gmra.mrb[0].mxu0 %v249
        %v475 = vpop.f32.mrb[0].mxu0
        %v476 = vadd.f32 0.0, %v475
        %v477 = vpop.f32.mrb[0].mxu0
        %478 = vmatprep.mubr.f32.mxu0 0.0
        %479 = vmatmul.mubr.f32.gmra.mrb[0].mxu0 %v250
        %v480 = vpop.f32.mrb[0].mxu0
        %v481 = vadd.f32 0.0, %v480
        %v482 = vpop.f32.mrb[0].mxu0
        %483 = vmatprep.mubr.f32.mxu0 0.0
        %484 = vmatmul.mubr.f32.gmra.mrb[0].mxu0 %v251
        %v485 = vpop.f32.mrb[0].mxu0
        %v486 = vadd.f32 0.0, %v485
        %v487 = vpop.f32.mrb[0].mxu0
        %488 = vmatprep.mubr.f32.mxu0 0.0
        %489 = vmatmul.mubr.f32.gmra.mrb[0].mxu0 %v252
        %v490 = vpop.f32.mrb[0].mxu0
        %v491 = vadd.f32 0.0, %v490
        %v492 = vpop.f32.mrb[0].mxu0
        %493 = vmatprep.mubr.f32.mxu0 0.0
        %494 = vmatmul.mubr.f32.gmra.mrb[0].mxu0 %v253
        %v495 = vpop.f32.mrb[0].mxu0
        %v496 = vadd.f32 0.0, %v495
        %v497 = vpop.f32.mrb[0].mxu0
        %498 = vmatprep.mubr.f32.mxu0 0.0
        %499 = vmatmul.mubr.f32.gmra.mrb[0].mxu0 %v254
        %v500 = vpop.f32.mrb[0].mxu0
        %v501 = vadd.f32 0.0, %v500
        %v502 = vpop.f32.mrb[0].mxu0
        %503 = vmatprep.mubr.f32.mxu0 0.0
        %504 = vmatmul.mubr.f32.gmra.mrb[0].mxu0 %v255
        %v505 = vpop.f32.mrb[0].mxu0
        %v506 = vadd.f32 0.0, %v505
        %v507 = vpop.f32.mrb[0].mxu0
        %508 = vmatprep.mubr.f32.mxu0 0.0
        %509 = vmatmul.mubr.f32.gmra.mrb[0].mxu0 %v256
        %v510 = vpop.f32.mrb[0].mxu0
        %v511 = vadd.f32 0.0, %v510
        %v512 = vpop.f32.mrb[0].mxu0
        %513 = vmatprep.mubr.f32.mxu0 0.0
        %514 = vmatmul.mubr.f32.gmra.mrb[0].mxu0 %v257
        %v515 = vpop.f32.mrb[0].mxu0
        %v516 = vadd.f32 0.0, %v515
        %v517 = vpop.f32.mrb[0].mxu0
        %518 = vmatprep.mubr.f32.mxu0 0.0
        %519 = vmatmul.mubr.f32.gmra.mrb[0].mxu0 %v258
        %v520 = vpop.f32.mrb[0].mxu0
        %v521 = vadd.f32 0.0, %v520
        %v522 = vpop.f32.mrb[0].mxu0
        %523 = vmatprep.mubr.f32.mxu0 0.0
        %524 = vmatmul.mubr.f32.gmra.mrb[0].mxu0 %v259
        %v525 = vpop.f32.mrb[0].mxu0
        %v526 = vadd.f32 0.0, %v525
        %v527 = vpop.f32.mrb[0].mxu0
        %528 = vmatprep.mubr.f32.mxu0 0.0
        %529 = vmatmul.mubr.f32.gmra.mrb[0].mxu0 %v260
        %v530 = vpop.f32.mrb[0].mxu0
        %v531 = vadd.f32 0.0, %v530
        %v532 = vpop.f32.mrb[0].mxu0
        %533 = vmatprep.mubr.f32.mxu0 0.0
        %534 = vmatmul.mubr.f32.gmra.mrb[0].mxu0 %v261
        %v535 = vpop.f32.mrb[0].mxu0
        %v536 = vadd.f32 0.0, %v535
        %v537 = vpop.f32.mrb[0].mxu0
        %538 = vmatprep.mubr.f32.mxu0 0.0
        %539 = vmatmul.mubr.f32.gmra.mrb[0].mxu0 %v262
        %v540 = vpop.f32.mrb[0].mxu0
        %v541 = vadd.f32 0.0, %v540
        %v542 = vpop.f32.mrb[0].mxu0
        %543 = vmatprep.mubr.f32.mxu0 0.0
        %544 = vmatmul.mubr.f32.gmra.mrb[0].mxu0 %v263
        %v545 = vpop.f32.mrb[0].mxu0
        %v546 = vadd.f32 0.0, %v545
        %v547 = vpop.f32.mrb[0].mxu0
        %548 = vmatprep.mubr.f32.mxu0 0.0
        %549 = vmatmul.mubr.f32.gmra.mrb[0].mxu0 %v264
        %v550 = vpop.f32.mrb[0].mxu0
        %v551 = vadd.f32 0.0, %v550
        %v552 = vpop.f32.mrb[0].mxu0
        %553 = vmatprep.mubr.f32.mxu0 0.0
        %554 = vmatmul.mubr.f32.gmra.mrb[0].mxu0 %v265
        %v555 = vpop.f32.mrb[0].mxu0
        %v556 = vadd.f32 0.0, %v555
        %v557 = vpop.f32.mrb[0].mxu0
        %558 = vmatprep.mubr.f32.mxu0 0.0
        %559 = vmatmul.mubr.f32.gmra.mrb[0].mxu0 %v266
        %v560 = vpop.f32.mrb[0].mxu0
        %v561 = vadd.f32 0.0, %v560
        %v562 = vpop.f32.mrb[0].mxu0
        %563 = vmatprep.mubr.f32.mxu0 0.0
        %564 = vmatmul.mubr.f32.gmra.mrb[0].mxu0 %v267
        %v565 = vpop.f32.mrb[0].mxu0
        %v566 = vadd.f32 0.0, %v565
        %v567 = vpop.f32.mrb[0].mxu0
        %568 = vmatprep.mubr.f32.mxu0 0.0
        %569 = vmatmul.mubr.f32.gmra.mrb[0].mxu0 %v268
        %v570 = vpop.f32.mrb[0].mxu0
        %v571 = vadd.f32 0.0, %v570
        %v572 = vpop.f32.mrb[0].mxu0
        %573 = vmatprep.mubr.f32.mxu0 0.0
        %574 = vmatmul.mubr.f32.gmra.mrb[0].mxu0 %v269
        %v575 = vpop.f32.mrb[0].mxu0
        %v576 = vadd.f32 0.0, %v575
        %v577 = vpop.f32.mrb[0].mxu0
        %578 = vmatprep.mubr.f32.mxu0 0.0
        %579 = vmatmul.mubr.f32.gmra.mrb[0].mxu0 %v270
        %v580 = vpop.f32.mrb[0].mxu0
        %v581 = vadd.f32 0.0, %v580
        %v582 = vpop.f32.mrb[0].mxu0
        %583 = vmatprep.mubr.f32.mxu0 0.0
        %584 = vmatmul.mubr.f32.gmra.mrb[0].mxu0 %v271
        %v585 = vpop.f32.mrb[0].mxu0
        %v586 = vadd.f32 0.0, %v585
        %v587 = vpop.f32.mrb[0].mxu0
        %588 = vmatprep.mubr.f32.mxu0 0.0
        %589 = vmatmul.mubr.f32.gmra.mrb[0].mxu0 %v272
        %v590 = vpop.f32.mrb[0].mxu0
        %v591 = vadd.f32 0.0, %v590
        %v592 = vpop.f32.mrb[0].mxu0
        %593 = vmatprep.mubr.f32.mxu0 0.0
        %594 = vmatmul.mubr.f32.gmra.mrb[0].mxu0 %v273
        %v595 = vpop.f32.mrb[0].mxu0
        %v596 = vadd.f32 0.0, %v595
        %v597 = vpop.f32.mrb[0].mxu0
        %598 = vmatprep.mubr.f32.mxu0 0.0
        %599 = vmatmul.mubr.f32.gmra.mrb[0].mxu0 %v274
        %v600 = vpop.f32.mrb[0].mxu0
        %v601 = vadd.f32 0.0, %v600
        %v602 = vpop.f32.mrb[0].mxu0
        %603 = vmatprep.mubr.f32.mxu0 0.0
        %604 = vmatmul.mubr.f32.gmra.mrb[0].mxu0 %v275
        %v605 = vpop.f32.mrb[0].mxu0
        %v606 = vadd.f32 0.0, %v605
        %v607 = vpop.f32.mrb[0].mxu0
        %608 = vmatprep.mubr.f32.mxu0 0.0
        %609 = vmatmul.mubr.f32.gmra.mrb[0].mxu0 %v276
        %v610 = vpop.f32.mrb[0].mxu0
        %v611 = vadd.f32 0.0, %v610
        %v612 = vpop.f32.mrb[0].mxu0
        %613 = vmatprep.mubr.f32.mxu0 0.0
        %614 = vmatmul.mubr.f32.gmra.mrb[0].mxu0 %v277
        %v615 = vpop.f32.mrb[0].mxu0
        %v616 = vadd.f32 0.0, %v615
        %v617 = vpop.f32.mrb[0].mxu0
        %618 = vmatprep.mubr.f32.mxu0 0.0
        %619 = vmatmul.mubr.f32.gmra.mrb[0].mxu0 %v278
        %v620 = vpop.f32.mrb[0].mxu0
        %v621 = vadd.f32 0.0, %v620
        %v622 = vpop.f32.mrb[0].mxu0
        %623 = vmatprep.mubr.f32.mxu0 0.0
        %624 = vmatmul.mubr.f32.gmra.mrb[0].mxu0 %v279
        %v625 = vpop.f32.mrb[0].mxu0
        %v626 = vadd.f32 0.0, %v625
        %v627 = vpop.f32.mrb[0].mxu0
        %628 = vmatprep.mubr.f32.mxu0 0.0
        %629 = vmatmul.mubr.f32.gmra.mrb[0].mxu0 %v280
        %v630 = vpop.f32.mrb[0].mxu0
        %v631 = vadd.f32 0.0, %v630
        %v632 = vpop.f32.mrb[0].mxu0
        %633 = vmatprep.mubr.f32.mxu0 0.0
        %634 = vmatmul.mubr.f32.gmra.mrb[0].mxu0 %v281
        %v635 = vpop.f32.mrb[0].mxu0
        %v636 = vadd.f32 0.0, %v635
        %v637 = vpop.f32.mrb[0].mxu0
        %638 = vmatprep.mubr.f32.mxu0 0.0
        %639 = vmatmul.mubr.f32.gmra.mrb[0].mxu0 %v282
        %v640 = vpop.f32.mrb[0].mxu0
        %v641 = vadd.f32 0.0, %v640
        %v642 = vpop.f32.mrb[0].mxu0
        %643 = vmatprep.mubr.f32.mxu0 0.0
        %644 = vmatmul.mubr.f32.gmra.mrb[0].mxu0 %v283
        %v645 = vpop.f32.mrb[0].mxu0
        %v646 = vadd.f32 0.0, %v645
        %v647 = vpop.f32.mrb[0].mxu0
        %648 = vmatprep.mubr.f32.mxu0 0.0
        %649 = vmatmul.mubr.f32.gmra.mrb[0].mxu0 %v284
        %v650 = vpop.f32.mrb[0].mxu0
        %v651 = vadd.f32 0.0, %v650
        %v652 = vpop.f32.mrb[0].mxu0
        %653 = vmatprep.mubr.f32.mxu0 0.0
        %654 = vmatmul.mubr.f32.gmra.mrb[0].mxu0 %v285
        %v655 = vpop.f32.mrb[0].mxu0
        %v656 = vadd.f32 0.0, %v655
        %v657 = vpop.f32.mrb[0].mxu0
        %658 = vmatprep.mubr.f32.mxu0 0.0
        %659 = vmatmul.mubr.f32.gmra.mrb[0].mxu0 %v286
        %v660 = vpop.f32.mrb[0].mxu0
        %v661 = vadd.f32 0.0, %v660
        %v662 = vpop.f32.mrb[0].mxu0
        %663 = vmatprep.mubr.f32.mxu0 0.0
        %664 = vmatmul.mubr.f32.gmra.mrb[0].mxu0 %v287
        %v665 = vpop.f32.mrb[0].mxu0
        %v666 = vadd.f32 0.0, %v665
        %v667 = vpop.f32.mrb[0].mxu0
        %668 = vmatprep.mubr.f32.mxu0 0.0
        %669 = vmatmul.mubr.f32.gmra.mrb[0].mxu0 %v288
        %v670 = vpop.f32.mrb[0].mxu0
        %v671 = vadd.f32 0.0, %v670
        %v672 = vpop.f32.mrb[0].mxu0
        %673 = vmatprep.mubr.f32.mxu0 0.0
        %674 = vmatmul.mubr.f32.gmra.mrb[0].mxu0 %v289
        %v675 = vpop.f32.mrb[0].mxu0
        %v676 = vadd.f32 0.0, %v675
        %v677 = vpop.f32.mrb[0].mxu0
        %678 = vmatprep.mubr.f32.mxu0 0.0
        %679 = vmatmul.mubr.f32.gmra.mrb[0].mxu0 %v290
        %v680 = vpop.f32.mrb[0].mxu0
        %v681 = vadd.f32 0.0, %v680
        %v682 = vpop.f32.mrb[0].mxu0
        %683 = vmatprep.mubr.f32.mxu0 0.0
        %684 = vmatmul.mubr.f32.gmra.mrb[0].mxu0 %v291
        %v685 = vpop.f32.mrb[0].mxu0
        %v686 = vadd.f32 0.0, %v685
        %v687 = vpop.f32.mrb[0].mxu0
        %688 = vmatprep.mubr.f32.mxu0 0.0
        %689 = vmatmul.mubr.f32.gmra.mrb[0].mxu0 %v292
        %v690 = vpop.f32.mrb[0].mxu0
        %v691 = vadd.f32 0.0, %v690
        %v692 = vpop.f32.mrb[0].mxu0
        %693 = vdwg.mxu0
        %vm694 = vcmask 261120
        %695 = vst.msk [vmem:[%s227] sm:$0xff] %vm694, %v376
        %696 = vst.msk [vmem:[%s227 + $0x8] sm:$0xff] %vm694, %v381
        %697 = vst.msk [vmem:[%s227 + $0x10] sm:$0xff] %vm694, %v386
        %698 = vst.msk [vmem:[%s227 + $0x18] sm:$0xff] %vm694, %v391
        %699 = vst.msk [vmem:[%s227 + $0x20] sm:$0xff] %vm694, %v396
        %700 = vst.msk [vmem:[%s227 + $0x28] sm:$0xff] %vm694, %v401
        %701 = vst.msk [vmem:[%s227 + $0x30] sm:$0xff] %vm694, %v406
        %702 = vst.msk [vmem:[%s227 + $0x38] sm:$0xff] %vm694, %v411
        %703 = vst.msk [vmem:[%s227 + $0x40] sm:$0xff] %vm694, %v416
        %704 = vst.msk [vmem:[%s227 + $0x48] sm:$0xff] %vm694, %v421
        %705 = vst.msk [vmem:[%s227 + $0x50] sm:$0xff] %vm694, %v426
        %706 = vst.msk [vmem:[%s227 + $0x58] sm:$0xff] %vm694, %v431
        %707 = vst.msk [vmem:[%s227 + $0x60] sm:$0xff] %vm694, %v436
        %708 = vst.msk [vmem:[%s227 + $0x68] sm:$0xff] %vm694, %v441
        %709 = vst.msk [vmem:[%s227 + $0x70] sm:$0xff] %vm694, %v446
        %710 = vst.msk [vmem:[%s227 + $0x78] sm:$0xff] %vm694, %v451
        %711 = vst.msk [vmem:[%s227 + $0x80] sm:$0xff] %vm694, %v456
        %712 = vst.msk [vmem:[%s227 + $0x88] sm:$0xff] %vm694, %v461
        %713 = vst.msk [vmem:[%s227 + $0x90] sm:$0xff] %vm694, %v466
        %714 = vst.msk [vmem:[%s227 + $0x98] sm:$0xff] %vm694, %v471
        %715 = vst.msk [vmem:[%s227 + $0xa0] sm:$0xff] %vm694, %v476
        %716 = vst.msk [vmem:[%s227 + $0xa8] sm:$0xff] %vm694, %v481
        %717 = vst.msk [vmem:[%s227 + $0xb0] sm:$0xff] %vm694, %v486
        %718 = vst.msk [vmem:[%s227 + $0xb8] sm:$0xff] %vm694, %v491
        %719 = vst.msk [vmem:[%s227 + $0xc0] sm:$0xff] %vm694, %v496
        %720 = vst.msk [vmem:[%s227 + $0xc8] sm:$0xff] %vm694, %v501
        %721 = vst.msk [vmem:[%s227 + $0xd0] sm:$0xff] %vm694, %v506
        %722 = vst.msk [vmem:[%s227 + $0xd8] sm:$0xff] %vm694, %v511
        %723 = vst.msk [vmem:[%s227 + $0xe0] sm:$0xff] %vm694, %v516
        %724 = vst.msk [vmem:[%s227 + $0xe8] sm:$0xff] %vm694, %v521
        %725 = vst.msk [vmem:[%s227 + $0xf0] sm:$0xff] %vm694, %v526
        %726 = vst.msk [vmem:[%s227 + $0xf8] sm:$0xff] %vm694, %v531
        %727 = vst.msk [vmem:[%s227 + $0x100] sm:$0xff] %vm694, %v536
        %728 = vst.msk [vmem:[%s227 + $0x108] sm:$0xff] %vm694, %v541
        %729 = vst.msk [vmem:[%s227 + $0x110] sm:$0xff] %vm694, %v546
        %730 = vst.msk [vmem:[%s227 + $0x118] sm:$0xff] %vm694, %v551
        %731 = vst.msk [vmem:[%s227 + $0x120] sm:$0xff] %vm694, %v556
        %732 = vst.msk [vmem:[%s227 + $0x128] sm:$0xff] %vm694, %v561
        %733 = vst.msk [vmem:[%s227 + $0x130] sm:$0xff] %vm694, %v566
        %734 = vst.msk [vmem:[%s227 + $0x138] sm:$0xff] %vm694, %v571
        %735 = vst.msk [vmem:[%s227 + $0x140] sm:$0xff] %vm694, %v576
        %736 = vst.msk [vmem:[%s227 + $0x148] sm:$0xff] %vm694, %v581
        %737 = vst.msk [vmem:[%s227 + $0x150] sm:$0xff] %vm694, %v586
        %738 = vst.msk [vmem:[%s227 + $0x158] sm:$0xff] %vm694, %v591
        %739 = vst.msk [vmem:[%s227 + $0x160] sm:$0xff] %vm694, %v596
        %740 = vst.msk [vmem:[%s227 + $0x168] sm:$0xff] %vm694, %v601
        %741 = vst.msk [vmem:[%s227 + $0x170] sm:$0xff] %vm694, %v606
        %742 = vst.msk [vmem:[%s227 + $0x178] sm:$0xff] %vm694, %v611
        %743 = vst.msk [vmem:[%s227 + $0x180] sm:$0xff] %vm694, %v616
        %744 = vst.msk [vmem:[%s227 + $0x188] sm:$0xff] %vm694, %v621
        %745 = vst.msk [vmem:[%s227 + $0x190] sm:$0xff] %vm694, %v626
        %746 = vst.msk [vmem:[%s227 + $0x198] sm:$0xff] %vm694, %v631
        %747 = vst.msk [vmem:[%s227 + $0x1a0] sm:$0xff] %vm694, %v636
        %748 = vst.msk [vmem:[%s227 + $0x1a8] sm:$0xff] %vm694, %v641
        %749 = vst.msk [vmem:[%s227 + $0x1b0] sm:$0xff] %vm694, %v646
        %750 = vst.msk [vmem:[%s227 + $0x1b8] sm:$0xff] %vm694, %v651
        %751 = vst.msk [vmem:[%s227 + $0x1c0] sm:$0xff] %vm694, %v656
        %752 = vst.msk [vmem:[%s227 + $0x1c8] sm:$0xff] %vm694, %v661
        %753 = vst.msk [vmem:[%s227 + $0x1d0] sm:$0xff] %vm694, %v666
        %754 = vst.msk [vmem:[%s227 + $0x1d8] sm:$0xff] %vm694, %v671
        %755 = vst.msk [vmem:[%s227 + $0x1e0] sm:$0xff] %vm694, %v676
        %756 = vst.msk [vmem:[%s227 + $0x1e8] sm:$0xff] %vm694, %v681
        %757 = vst.msk [vmem:[%s227 + $0x1f0] sm:$0xff] %vm694, %v686
        %758 = vst.msk [vmem:[%s227 + $0x1f8] sm:$0xff] %vm694, %v691
        %s759 = smul.u32 64, %s22
        %p760 = scmp.lt.s32.totalorder %s21, 1
        %s761 = scalar_select %p760, %s21, 1
        %p762 = scmp.lt.s32.totalorder %s23, 3
        %s763 = scalar_select %p762, %s23, 3
        %p764 = scmp.lt.s32.totalorder %s759, 63
        %s765 = scalar_select %p764, %s759, 63
        %s766 = smul.addr %s763, 64
        %s767 = sadd.s32 %s765, %s766
        %s768 = smul.addr %s761, 256
        %s769 = sadd.s32 %s767, %s768
        %s770 = smul.addr %s769, 8
        %s771 = scalar_lea.vmem %s2, %s770
        // Predicated region
        $region33: #{tpu_custom_call.1} parent=27 // pred_check
          %p772 = pneg %p111
        $region34: #{tpu_custom_call.1} parent=27 // pred_check_branch
          %774 = sbr.rel (%p772) target = $region36
        $region35: #{tpu_custom_call.1} parent=27 // pred_region
          %s775 = smul.u32 64, %s22
        $region36: #{tpu_custom_call.1} parent=27 // pred_fallthru
          _
      $region28: #{tpu_custom_call.1} parent=5 // pred_fallthru
        _
      %p776 = scmp.le.s32.totalorder 2, %s11
      // Predicated region
      $region37: #{tpu_custom_call.1} parent=5 // pred_check
        %p777 = pneg %p776
      $region38: #{tpu_custom_call.1} parent=5 // pred_check_branch
        %779 = sbr.rel (%p777) target = $region40
      $region39: #{tpu_custom_call.1} parent=5 // pred_region
        %s780 = ssub.s32 %s11, 2
        // Predicated region
        $region41: #{tpu_custom_call.1} parent=39 // pred_check
          %p781 = pneg %p117
        $region42: #{tpu_custom_call.1} parent=39 // pred_check_branch
          %783 = sbr.rel (%p781) target = $region44
        $region43: #{tpu_custom_call.1} parent=39 // pred_region
          %s784 = smul.u32 64, %s25
          %p785 = scmp.lt.s32.totalorder %s24, 1
          %s786 = scalar_select %p785, %s24, 1
          %p787 = scmp.lt.s32.totalorder %s26, 3
          %s788 = scalar_select %p787, %s26, 3
          %p789 = scmp.lt.s32.totalorder %s784, 63
          %s790 = scalar_select %p789, %s784, 63
          %s791 = smul.addr %s788, 64
          %s792 = sadd.s32 %s790, %s791
          %s793 = smul.addr %s786, 256
          %s794 = sadd.s32 %s792, %s793
          %s795 = smul.addr %s794, 8
          %s796 = scalar_lea.vmem %s2, %s795
        $region44: #{tpu_custom_call.1} parent=39 // pred_fallthru
          _
      $region40: #{tpu_custom_call.1} parent=5 // pred_fallthru
        _
    $region6: #{tpu_custom_call.1} parent=1 // loop_footer
      %s15 = sadd.s32 1, %s11
    $region7: #{tpu_custom_call.1} parent=1 // loop_footer_branch
      %10 = sbr.rel target = $region3
    $region8: #{tpu_custom_call.1} parent=1 // loop_exit
      _
    %797 = vsyncpa [#allocation3], 1
    %s798 = scalar_lea.sflag [#allocation3], 1
    %799 = vsyncpa %s798, 1

</llo_original>
